<compile_context>
chip_gen: v5e
topology: v5e:2x2
jax: 0.10.0
libtpu: 0.0.40
codegen_flags: <defaults>
</compile_context>

<pallas_src>
import jax
import jax.numpy as jnp
from jax.experimental import pallas as pl
from jax.experimental.pallas import tpu as pltpu


def _autorec_kernel(h_alt_ref, sel_ref, x_ref, o_ref):
    # h_alt_ref: (1, 256)  f32   alternating [h0, h1, h0, h1, ...] lane vector
    # sel_ref:   (256,128) bf16  0/1 pair-sum matrix, SEL[c, k] = (c // 2 == k)
    # x_ref:     (R, 256)  f32/bf16  128 samples/row, features interleaved on lanes
    # o_ref:     (R, 128)  f32
    #
    # Step 1 (VPU, exact f32): scale every lane by its feature's weight.
    p = x_ref[...].astype(jnp.float32) * h_alt_ref[...]
    # Step 2 (MXU): de-interleave + pair-sum in one shot:
    #   out[r, k] = p[r, 2k] + p[r, 2k+1] = (p @ SEL)[r, k]
    # The MXU multiplies in bf16, so feed it an exact 3-term bf16 split of p
    # (p = a0 + a1 + a2 to ~2^-27 relative); SEL's 0/1 entries are bf16-exact,
    # f32 accumulation on the MXU => result matches f32 math to ~1e-7.
    sel = sel_ref[...]
    a = p.astype(jnp.bfloat16)
    acc = jnp.dot(a, sel, preferred_element_type=jnp.float32)
    p = p - a.astype(jnp.float32)
    a = p.astype(jnp.bfloat16)
    acc += jnp.dot(a, sel, preferred_element_type=jnp.float32)
    p = p - a.astype(jnp.float32)
    a = p.astype(jnp.bfloat16)
    acc += jnp.dot(a, sel, preferred_element_type=jnp.float32)
    o_ref[...] = acc


def _pick_rows(m, tile_rows, sub):
    """Rows (second-minor dim) of the streamed block per grid step.

    Constraints / goals:
      * multiple of `sub` sublanes (8 for f32, 16 for bf16) unless it covers
        the whole array (R == M is always legal),
      * >= ~512 rows (>= 0.5 MiB f32 data block) to amortize the ~0.35 us
        per-grid-step overhead and run the DMA pipeline near the HBM roofline,
      * small enough that the grid has ~>= 8 steps when there is enough work,
        so both v7x TensorCores get fed and compute/DMA stay overlapped,
      * default 2048 rows => 2 MiB data + 1 MiB out block, double-buffered
        (~6 MiB) + in-kernel temporaries fits the v5e 16 MiB scoped default.
    """
    tile_rows = max(sub, (tile_rows // sub) * sub)
    r_split = sub * pl.cdiv(pl.cdiv(m, 8), sub)   # ~m/8, sublane-aligned
    r = min(tile_rows, max(512, r_split))
    return m if r >= m else r


def autorec_forward(hidden, data, *, tile_rows=2048):
    """hidden: (2,) float, data: (N, 2) float -> (N,) float32."""
    n, f = data.shape
    assert f == 2, "AutoRec uses a 2-element hidden parameter"

    # Stream bf16 as-is (up-cast happens in vregs inside the kernel); anything
    # else that isn't f32 gets one cast (no extra pass for the common f32 case).
    if data.dtype != jnp.float32 and data.dtype != jnp.bfloat16:
        data = data.astype(jnp.float32)
    hidden = hidden.astype(jnp.float32)   # 2 scalars, free

    # Row-major view: (N, 2) -> (M, 256); 128 samples per row, features
    # interleaved on the lane axis.  No transpose, no full-array pad.
    m = pl.cdiv(n, 128)
    if n % 128 == 0:
        data2d = data.reshape(m, 256)
    else:
        flat = data.reshape(-1)
        flat = jnp.pad(flat, (0, m * 256 - 2 * n))   # one tiny tail pad only
        data2d = flat.reshape(m, 256)

    # Tiny constants derived from the parameter (hoisted once; ~65 KiB total,
    # fetched into VMEM a single time since their block index never changes).
    h_alt = jnp.tile(hidden, 128).reshape(1, 256)                   # [h0,h1,...]
    sel = jnp.repeat(jnp.eye(128, dtype=jnp.bfloat16), 2, axis=0)   # (256,128) 0/1

    sub = 16 if data2d.dtype == jnp.bfloat16 else 8
    r = _pick_rows(m, tile_rows, sub)
    grid = (pl.cdiv(m, r),)   # partial last block handled by Pallas masking

    item = jnp.dtype(data2d.dtype).itemsize
    out2d = pl.pallas_call(
        _autorec_kernel,
        out_shape=jax.ShapeDtypeStruct((m, 128), jnp.float32),
        grid=grid,
        in_specs=[
            pl.BlockSpec((1, 256), lambda i: (0, 0)),     # h_alt: resident constant
            pl.BlockSpec((256, 128), lambda i: (0, 0)),   # sel:   resident constant
            pl.BlockSpec((r, 256), lambda i: (i, 0)),     # data:  streamed, dense
        ],
        out_specs=pl.BlockSpec((r, 128), lambda i: (i, 0)),
        compiler_params=pltpu.CompilerParams(
            dimension_semantics=("parallel",),            # megacore sharding on v7x
            vmem_limit_bytes=32 * 1024 * 1024,            # headroom on v5e's 16 MiB default
        ),
        cost_estimate=pl.CostEstimate(
            flops=3 * 2 * m * 256 * 128,                  # the 3 bf16 pair-sum matmuls
            transcendentals=0,
            bytes_accessed=m * 256 * item + m * 128 * 4 + sel.size * 2 + 256 * 4,
        ),
    )(h_alt, sel, data2d)

    out = out2d.reshape(-1)      # free: (M,128) f32 tiled layout is row-major
    if m * 128 != n:
        out = out[:n]            # only a non-128-multiple N pays this small slice
    return out


if __name__ == "__main__":
    key = jax.random.PRNGKey(0)
    k_hidden, k_data = jax.random.split(key)

    # Parameter: torch.empty(2).normal_() -> deterministic normal draw here.
    hidden = jax.random.normal(k_hidden, (2,), dtype=jnp.float32)

    # Small batch, deliberately not a multiple of 128 to exercise the
    # tail-pad + partial-block path.
    n = 300
    data = jax.random.normal(k_data, (n, 2), dtype=jnp.float32)

    out = autorec_forward(hidden, data)
    out = jax.block_until_ready(out)

    # Reference (same math as torch.sum(hidden * data, axis=1)).
    ref = jnp.sum(hidden[None, :] * data, axis=1)
    assert out.shape == (n,)
    assert jnp.allclose(out, ref, atol=1e-5, rtol=1e-5), float(
        jnp.max(jnp.abs(out - ref))
    )

    print("KERNEL_OK")
</pallas_src>

<mosaic_0001>
module attributes {stable_mosaic.version = 11 : i64} {
  func.func @_autorec_kernel(%arg0: i32, %arg1: memref<1x256xf32, #tpu.memory_space<vmem>>, %arg2: memref<256x128xbf16, #tpu.memory_space<vmem>>, %arg3: memref<3x256xf32, #tpu.memory_space<vmem>>, %arg4: memref<3x128xf32, #tpu.memory_space<vmem>>) attributes {dimension_semantics = [#tpu.dimension_semantics<parallel>], iteration_bounds = array<i64: 1>, scalar_prefetch = 0 : i64, scratch_operands = 0 : i64, tpu.core_type = #tpu.core_type<tc>, window_params = [{pipeline_mode = #tpu.pipeline_mode<synchronous>, transform_indices = @transform_0, window_bounds = array<i64: 1, 256>}, {pipeline_mode = #tpu.pipeline_mode<synchronous>, transform_indices = @transform_1, window_bounds = array<i64: 256, 128>}, {transform_indices = @transform_2, window_bounds = array<i64: 3, 256>}, {transform_indices = @transform_3, window_bounds = array<i64: 3, 128>}]} {
    %c0 = arith.constant 0 : index
    %c0_0 = arith.constant 0 : index
    %0 = vector.load %arg3[%c0, %c0_0] : memref<3x256xf32, #tpu.memory_space<vmem>>, vector<3x256xf32>
    %c0_1 = arith.constant 0 : index
    %c0_2 = arith.constant 0 : index
    %1 = vector.load %arg1[%c0_1, %c0_2] : memref<1x256xf32, #tpu.memory_space<vmem>>, vector<1x256xf32>
    %2 = vector.broadcast %1 : vector<1x256xf32> to vector<3x256xf32>
    %3 = arith.mulf %0, %2 : vector<3x256xf32>
    %c0_3 = arith.constant 0 : index
    %c0_4 = arith.constant 0 : index
    %4 = vector.load %arg2[%c0_3, %c0_4] : memref<256x128xbf16, #tpu.memory_space<vmem>>, vector<256x128xbf16>
    %5 = arith.truncf %3 : vector<3x256xf32> to vector<3x256xbf16>
    %cst = arith.constant dense<0.000000e+00> : vector<3x128xf32>
    %6 = tpu.matmul %5, %4, %cst {dimension_numbers = #tpu.dot_dimension_numbers<[1], [0], [0], [1], [0, 0, 1, 1], [], []>} : vector<3x256xbf16>, vector<256x128xbf16>, vector<3x128xf32> -> vector<3x128xf32>
    %7 = arith.extf %5 : vector<3x256xbf16> to vector<3x256xf32>
    %8 = arith.subf %3, %7 : vector<3x256xf32>
    %9 = arith.truncf %8 : vector<3x256xf32> to vector<3x256xbf16>
    %cst_5 = arith.constant dense<0.000000e+00> : vector<3x128xf32>
    %10 = tpu.matmul %9, %4, %cst_5 {dimension_numbers = #tpu.dot_dimension_numbers<[1], [0], [0], [1], [0, 0, 1, 1], [], []>} : vector<3x256xbf16>, vector<256x128xbf16>, vector<3x128xf32> -> vector<3x128xf32>
    %11 = arith.addf %6, %10 : vector<3x128xf32>
    %12 = arith.extf %9 : vector<3x256xbf16> to vector<3x256xf32>
    %13 = arith.subf %8, %12 : vector<3x256xf32>
    %14 = arith.truncf %13 : vector<3x256xf32> to vector<3x256xbf16>
    %cst_6 = arith.constant dense<0.000000e+00> : vector<3x128xf32>
    %15 = tpu.matmul %14, %4, %cst_6 {dimension_numbers = #tpu.dot_dimension_numbers<[1], [0], [0], [1], [0, 0, 1, 1], [], []>} : vector<3x256xbf16>, vector<256x128xbf16>, vector<3x128xf32> -> vector<3x128xf32>
    %16 = arith.addf %11, %15 : vector<3x128xf32>
    %c0_7 = arith.constant 0 : index
    %c0_8 = arith.constant 0 : index
    %17 = vector.load %arg4[%c0_7, %c0_8] : memref<3x128xf32, #tpu.memory_space<vmem>>, vector<3x128xf32>
    tpu.vector_store %arg4[%c0_7, %c0_8], %16 {strides = array<i32>} : memref<3x128xf32, #tpu.memory_space<vmem>>, vector<3x128xf32>,
    return
  }
  func.func @transform_0(%arg0: i32) -> (i32, i32) {
    %c0_i32 = arith.constant 0 : i32
    %c0_i32_0 = arith.constant 0 : i32
    %c0_i32_1 = arith.constant 0 : i32
    return %c0_i32, %c0_i32_0 : i32, i32
  }
  func.func @transform_1(%arg0: i32) -> (i32, i32) {
    %c0_i32 = arith.constant 0 : i32
    %c0_i32_0 = arith.constant 0 : i32
    %c0_i32_1 = arith.constant 0 : i32
    return %c0_i32, %c0_i32_0 : i32, i32
  }
  func.func @transform_2(%arg0: i32) -> (i32, i32) {
    %c0_i32 = arith.constant 0 : i32
    %c0_i32_0 = arith.constant 0 : i32
    return %arg0, %c0_i32 : i32, i32
  }
  func.func @transform_3(%arg0: i32) -> (i32, i32) {
    %c0_i32 = arith.constant 0 : i32
    %c0_i32_0 = arith.constant 0 : i32
    return %arg0, %c0_i32 : i32, i32
  }
}

</mosaic_0001>

<llo_original>
// kernel: tpu_custom_call.1
$region0: #{tpu_custom_call.1}
  #allocation0 [shape = 'u32[]', space=smem, size = 0x4, offset = 0x4, fixed_abs, tag = 'smem constant byte address 0x4 - core index']
  #allocation1 [shape = 'u32[72,128]{1,0:T(1,128)}', space=vmem, size = 0x9000, scoped, tag = 'internal scratch']
  %s0 = inlined_call_operand.hbm [shape: f32[1,256], index: 0, kind: input, shape index: {}]
  %s1 = inlined_call_operand.hbm [shape: bf16[256,128], index: 1, kind: input, shape index: {}]
  %s2 = inlined_call_operand.hbm [shape: f32[3,256], index: 2, kind: input, shape index: {}]
  %s3 = inlined_call_operand.hbm [shape: f32[3,128], index: 3, kind: output, shape index: {}]
  %s4 = sld [smem:[#allocation0]]
  $region34: #{tpu_custom_call.1} parent=0
    _
  %s6 = ssub.s32 1, %s4
  %s7 = scalar_select 0, %s6, %s4
  $region1: #{tpu_custom_call.1} parent=0
    #allocation2 [shape = 'u8[1024]{0}', space=vmem, size = 0x400, scoped, tag = 'input window, operand 0, single buffered']
    #allocation3 [shape = 's32[1]{0}', space=sflag, size = 0x4, scoped, tag = 'scoped memory for tpu_custom_call.1']
    #allocation4 [shape = 's32[1]{0}', space=sflag, size = 0x4, scoped, tag = 'scoped memory for tpu_custom_call.1']
    #allocation5 [shape = 'u8[65536]{0}', space=vmem, size = 0x10000, scoped, tag = 'input window, operand 1, single buffered']
    #allocation6 [shape = 's32[1]{0}', space=sflag, size = 0x4, scoped, tag = 'scoped memory for tpu_custom_call.1']
    #allocation7 [shape = 'u8[4096]{0}', space=vmem, size = 0x1000, scoped, tag = 'input window, operand 2, single buffered']
    #allocation8 [shape = 'u8[2048]{0}', space=vmem, size = 0x800, scoped, tag = 'output window, operand 0, single buffered']
    %8 = vsyncpa [#allocation3], 0
    %9 = vsyncpa [#allocation6], 0
    %10 = vsyncpa [#allocation4], 0
    // Predicated region
    $region2: #{tpu_custom_call.1} parent=1 // pred_check
      _
    $region3: #{tpu_custom_call.1} parent=1 // pred_check_branch
      %12 = sbr.rel (0) target = $region5
    $region4: #{tpu_custom_call.1} parent=1 // pred_region
      %14 = vsyncadd [#allocation3], 0
      %s16 = sshll.u32 %s0, 4
      %s17 = int_to_ptr.hbm [resolvable:$true] %s16
      %s18 = sshll.u32 [#allocation2], 4
      %s19 = int_to_ptr.vmem [resolvable:$true] %s18
      %21 = dma.hbm_to_vmem [thread:$0]  %s17, 32, %s19, [#allocation3]
    $region5: #{tpu_custom_call.1} parent=1 // pred_fallthru
      _
    // Predicated region
    $region6: #{tpu_custom_call.1} parent=1 // pred_check
      _
    $region7: #{tpu_custom_call.1} parent=1 // pred_check_branch
      %23 = sbr.rel (0) target = $region9
    $region8: #{tpu_custom_call.1} parent=1 // pred_region
      %25 = vsyncadd [#allocation6], 0
      %s26 = sshll.u32 %s1, 4
      %s27 = int_to_ptr.hbm [resolvable:$true] %s26
      %s28 = sshll.u32 [#allocation5], 4
      %s29 = int_to_ptr.vmem [resolvable:$true] %s28
      %34 = dma.hbm_to_vmem [thread:$0]  %s27, 2048, %s29, [#allocation6], 64, 64, 4
    $region9: #{tpu_custom_call.1} parent=1 // pred_fallthru
      _
    // Predicated region
    $region10: #{tpu_custom_call.1} parent=1 // pred_check
      _
    $region11: #{tpu_custom_call.1} parent=1 // pred_check_branch
      %36 = sbr.rel (0) target = $region13
    $region12: #{tpu_custom_call.1} parent=1 // pred_region
      %38 = vsyncadd [#allocation6], 0
      %s40 = sshll.u32 %s2, 4
      %s41 = int_to_ptr.hbm [resolvable:$true] %s40
      %s42 = sshll.u32 [#allocation7], 4
      %s43 = int_to_ptr.vmem [resolvable:$true] %s42
      %45 = dma.hbm_to_vmem [thread:$0]  %s41, 128, %s43, [#allocation6]
    $region13: #{tpu_custom_call.1} parent=1 // pred_fallthru
      _
    // Predicated region
    $region14: #{tpu_custom_call.1} parent=1 // pred_check
      _
    $region15: #{tpu_custom_call.1} parent=1 // pred_check_branch
      %47 = sbr.rel (0) target = $region17
    $region16: #{tpu_custom_call.1} parent=1 // pred_region
      %49 = dma.done [#allocation3], 32
    $region17: #{tpu_custom_call.1} parent=1 // pred_fallthru
      _
    // Predicated region
    $region18: #{tpu_custom_call.1} parent=1 // pred_check
      _
    $region19: #{tpu_custom_call.1} parent=1 // pred_check_branch
      %51 = sbr.rel (0) target = $region21
    $region20: #{tpu_custom_call.1} parent=1 // pred_region
      %53 = dma.done [#allocation6], 2048
    $region21: #{tpu_custom_call.1} parent=1 // pred_fallthru
      _
    // Predicated region
    $region22: #{tpu_custom_call.1} parent=1 // pred_check
      _
    $region23: #{tpu_custom_call.1} parent=1 // pred_check_branch
      %55 = sbr.rel (0) target = $region25
    $region24: #{tpu_custom_call.1} parent=1 // pred_region
      %57 = dma.done [#allocation6], 128
    $region25: #{tpu_custom_call.1} parent=1 // pred_fallthru
      _
    %v58 = vld [vmem:[#allocation7] sm:$0x77]
    %v59 = vld [vmem:[#allocation2] sm:$0x3]
    %v61 = vperm.slane %v59, 0
    %v62 = vperm.slane %v59, 1
    %v63 = vrot.slane %v62, 4
    %vm64 = vcmask 1043456
    %v65 = vsel %vm64, %v61, %v63
    %v67 = vmul.f32 %v58, %v65
    %v68 = vld [vmem:[#allocation5] sm:$0xf]
    %v69 = vld [vmem:[#allocation5 + $0x4] sm:$0xf]
    %v70 = vld [vmem:[#allocation5 + $0x8] sm:$0xf]
    %v71 = vld [vmem:[#allocation5 + $0xc] sm:$0xf]
    %v72 = vld [vmem:[#allocation5 + $0x10] sm:$0xf]
    %v73 = vld [vmem:[#allocation5 + $0x14] sm:$0xf]
    %v74 = vld [vmem:[#allocation5 + $0x18] sm:$0xf]
    %v75 = vld [vmem:[#allocation5 + $0x1c] sm:$0xf]
    %v76 = vld [vmem:[#allocation5 + $0x20] sm:$0xf]
    %v77 = vld [vmem:[#allocation5 + $0x24] sm:$0xf]
    %v78 = vld [vmem:[#allocation5 + $0x28] sm:$0xf]
    %v79 = vld [vmem:[#allocation5 + $0x2c] sm:$0xf]
    %v80 = vld [vmem:[#allocation5 + $0x30] sm:$0xf]
    %v81 = vld [vmem:[#allocation5 + $0x34] sm:$0xf]
    %v82 = vld [vmem:[#allocation5 + $0x38] sm:$0xf]
    %v83 = vld [vmem:[#allocation5 + $0x3c] sm:$0xf]
    %v84 = vld [vmem:[#allocation5 + $0x40] sm:$0xf]
    %v85 = vld [vmem:[#allocation5 + $0x44] sm:$0xf]
    %v86 = vld [vmem:[#allocation5 + $0x48] sm:$0xf]
    %v87 = vld [vmem:[#allocation5 + $0x4c] sm:$0xf]
    %v88 = vld [vmem:[#allocation5 + $0x50] sm:$0xf]
    %v89 = vld [vmem:[#allocation5 + $0x54] sm:$0xf]
    %v90 = vld [vmem:[#allocation5 + $0x58] sm:$0xf]
    %v91 = vld [vmem:[#allocation5 + $0x5c] sm:$0xf]
    %v92 = vld [vmem:[#allocation5 + $0x60] sm:$0xf]
    %v93 = vld [vmem:[#allocation5 + $0x64] sm:$0xf]
    %v94 = vld [vmem:[#allocation5 + $0x68] sm:$0xf]
    %v95 = vld [vmem:[#allocation5 + $0x6c] sm:$0xf]
    %v96 = vld [vmem:[#allocation5 + $0x70] sm:$0xf]
    %v97 = vld [vmem:[#allocation5 + $0x74] sm:$0xf]
    %v98 = vld [vmem:[#allocation5 + $0x78] sm:$0xf]
    %v99 = vld [vmem:[#allocation5 + $0x7c] sm:$0xf]
    %101 = vst [vmem:[#allocation1] ss:$2 sm:$0xff] %v67
    %v102 = vld.sshfl [vmem:[#allocation1] sm:$0xff pattern:$0x75316420]
    %v103 = vld.sshfl [vmem:[#allocation1 + $0x8] sm:$0xff pattern:$0x75316420]
    %v106 = vpack.c.bf16 %v103, %v102
    %v107 = vunpack.c.l.bf16 %v106
    %v108 = vunpack.c.h.bf16 %v106
    %v111 = vrot.slane %v108, 4
    %v112 = vsel %vm64, %v107, %v111
    %v114 = vsub.f32 %v67, %v112
    %116 = vst [vmem:[#allocation1] ss:$2 sm:$0xff] %v114
    %v117 = vld.sshfl [vmem:[#allocation1] sm:$0xff pattern:$0x75316420]
    %v118 = vld.sshfl [vmem:[#allocation1 + $0x8] sm:$0xff pattern:$0x75316420]
    %v121 = vpack.c.bf16 %v118, %v117
    %v123 = vunpack.c.l.b16 %v121
    %v124 = vunpack.c.h.b16 %v121
    %v125 = vpack.c.b16 %v123, %v123
    %v126 = vpack.c.b16 %v124, %v124
    %v161 = vunpack.c.l.b16 %v68
    %v162 = vunpack.c.l.b16 %v69
    %v163 = vunpack.c.l.b16 %v70
    %v164 = vunpack.c.l.b16 %v71
    %v165 = vunpack.c.l.b16 %v72
    %v166 = vunpack.c.l.b16 %v73
    %v167 = vunpack.c.l.b16 %v74
    %v168 = vunpack.c.l.b16 %v75
    %v169 = vunpack.c.l.b16 %v76
    %v170 = vunpack.c.l.b16 %v77
    %v171 = vunpack.c.l.b16 %v78
    %v172 = vunpack.c.l.b16 %v79
    %v173 = vunpack.c.l.b16 %v80
    %v174 = vunpack.c.l.b16 %v81
    %v175 = vunpack.c.l.b16 %v82
    %v176 = vunpack.c.l.b16 %v83
    %v177 = vunpack.c.l.b16 %v84
    %v178 = vunpack.c.l.b16 %v85
    %v179 = vunpack.c.l.b16 %v86
    %v180 = vunpack.c.l.b16 %v87
    %v181 = vunpack.c.l.b16 %v88
    %v182 = vunpack.c.l.b16 %v89
    %v183 = vunpack.c.l.b16 %v90
    %v184 = vunpack.c.l.b16 %v91
    %v185 = vunpack.c.l.b16 %v92
    %v186 = vunpack.c.l.b16 %v93
    %v187 = vunpack.c.l.b16 %v94
    %v188 = vunpack.c.l.b16 %v95
    %v189 = vunpack.c.l.b16 %v96
    %v190 = vunpack.c.l.b16 %v97
    %v191 = vunpack.c.l.b16 %v98
    %v192 = vunpack.c.l.b16 %v99
    %v193 = vpack.c.b16 %v162, %v161
    %v194 = vpack.c.b16 %v164, %v163
    %v195 = vpack.c.b16 %v166, %v165
    %v196 = vpack.c.b16 %v168, %v167
    %v197 = vpack.c.b16 %v170, %v169
    %v198 = vpack.c.b16 %v172, %v171
    %v199 = vpack.c.b16 %v174, %v173
    %v200 = vpack.c.b16 %v176, %v175
    %v201 = vpack.c.b16 %v178, %v177
    %v202 = vpack.c.b16 %v180, %v179
    %v203 = vpack.c.b16 %v182, %v181
    %v204 = vpack.c.b16 %v184, %v183
    %v205 = vpack.c.b16 %v186, %v185
    %v206 = vpack.c.b16 %v188, %v187
    %v207 = vpack.c.b16 %v190, %v189
    %v208 = vpack.c.b16 %v192, %v191
    %225 = vmatpush.bf16.msra.mxu0 %v200
    %226 = vmatpush.bf16.msra.mxu0 %v199
    %227 = vmatpush.bf16.msra.mxu0 %v198
    %228 = vmatpush.bf16.msra.mxu0 %v197
    %229 = vmatpush.bf16.msra.mxu0 %v196
    %230 = vmatpush.bf16.msra.mxu0 %v195
    %231 = vmatpush.bf16.msra.mxu0 %v194
    %232 = vmatpush.bf16.msra.mxu0 %v193
    %233 = vmatmul.bf16.gmra.mxu0 %v125
    %v234 = vpop.f32.mrf.mxu0
    %v235 = vadd.f32 0.0, %v234
    %v236 = vpop.f32.mrf.mxu0
    %237 = vdwg.mxu0
    %238 = vmatpush.bf16.msra.mxu0 %v208
    %239 = vmatpush.bf16.msra.mxu0 %v207
    %240 = vmatpush.bf16.msra.mxu0 %v206
    %241 = vmatpush.bf16.msra.mxu0 %v205
    %242 = vmatpush.bf16.msra.mxu0 %v204
    %243 = vmatpush.bf16.msra.mxu0 %v203
    %244 = vmatpush.bf16.msra.mxu0 %v202
    %245 = vmatpush.bf16.msra.mxu0 %v201
    %246 = vmatmul.bf16.gmra.mxu0 %v126
    %v247 = vpop.f32.mrf.mxu0
    %v248 = vadd.f32 %v235, %v247
    %v249 = vpop.f32.mrf.mxu0
    %250 = vdwg.mxu0
    %v252 = vunpack.c.l.b16 %v106
    %v253 = vunpack.c.h.b16 %v106
    %v254 = vpack.c.b16 %v252, %v252
    %v255 = vpack.c.b16 %v253, %v253
    %258 = vmatpush.bf16.msra.mxu0 %v200
    %259 = vmatpush.bf16.msra.mxu0 %v199
    %260 = vmatpush.bf16.msra.mxu0 %v198
    %261 = vmatpush.bf16.msra.mxu0 %v197
    %262 = vmatpush.bf16.msra.mxu0 %v196
    %263 = vmatpush.bf16.msra.mxu0 %v195
    %264 = vmatpush.bf16.msra.mxu0 %v194
    %265 = vmatpush.bf16.msra.mxu0 %v193
    %266 = vmatmul.bf16.gmra.mxu0 %v254
    %v267 = vpop.f32.mrf.mxu0
    %v268 = vadd.f32 %v248, %v267
    %v269 = vpop.f32.mrf.mxu0
    %270 = vdwg.mxu0
    %271 = vmatpush.bf16.msra.mxu0 %v208
    %272 = vmatpush.bf16.msra.mxu0 %v207
    %273 = vmatpush.bf16.msra.mxu0 %v206
    %274 = vmatpush.bf16.msra.mxu0 %v205
    %275 = vmatpush.bf16.msra.mxu0 %v204
    %276 = vmatpush.bf16.msra.mxu0 %v203
    %277 = vmatpush.bf16.msra.mxu0 %v202
    %278 = vmatpush.bf16.msra.mxu0 %v201
    %279 = vmatmul.bf16.gmra.mxu0 %v255
    %v280 = vpop.f32.mrf.mxu0
    %v281 = vadd.f32 %v268, %v280
    %v282 = vpop.f32.mrf.mxu0
    %283 = vdwg.mxu0
    %v284 = vunpack.c.l.bf16 %v121
    %v285 = vunpack.c.h.bf16 %v121
    %v288 = vrot.slane %v285, 4
    %v289 = vsel %vm64, %v284, %v288
    %v291 = vsub.f32 %v114, %v289
    %293 = vst [vmem:[#allocation1] ss:$2 sm:$0xff] %v291
    %v294 = vld.sshfl [vmem:[#allocation1] sm:$0xff pattern:$0x75316420]
    %v295 = vld.sshfl [vmem:[#allocation1 + $0x8] sm:$0xff pattern:$0x75316420]
    %v298 = vpack.c.bf16 %v294, %v294
    %v299 = vpack.c.bf16 %v295, %v295
    %300 = vmatpush.bf16.msra.mxu0 %v200
    %301 = vmatpush.bf16.msra.mxu0 %v199
    %302 = vmatpush.bf16.msra.mxu0 %v198
    %303 = vmatpush.bf16.msra.mxu0 %v197
    %304 = vmatpush.bf16.msra.mxu0 %v196
    %305 = vmatpush.bf16.msra.mxu0 %v195
    %306 = vmatpush.bf16.msra.mxu0 %v194
    %307 = vmatpush.bf16.msra.mxu0 %v193
    %308 = vmatmul.bf16.gmra.mxu0 %v298
    %v309 = vpop.f32.mrf.mxu0
    %v310 = vadd.f32 0.0, %v309
    %v311 = vpop.f32.mrf.mxu0
    %312 = vdwg.mxu0
    %313 = vmatpush.bf16.msra.mxu0 %v208
    %314 = vmatpush.bf16.msra.mxu0 %v207
    %315 = vmatpush.bf16.msra.mxu0 %v206
    %316 = vmatpush.bf16.msra.mxu0 %v205
    %317 = vmatpush.bf16.msra.mxu0 %v204
    %318 = vmatpush.bf16.msra.mxu0 %v203
    %319 = vmatpush.bf16.msra.mxu0 %v202
    %320 = vmatpush.bf16.msra.mxu0 %v201
    %321 = vmatmul.bf16.gmra.mxu0 %v299
    %v322 = vpop.f32.mrf.mxu0
    %v323 = vadd.f32 %v310, %v322
    %v324 = vpop.f32.mrf.mxu0
    %325 = vdwg.mxu0
    %v326 = vadd.f32 %v281, %v323
    %327 = vst [vmem:[#allocation8] sm:$0x7] %v326
    // Predicated region
    $region26: #{tpu_custom_call.1} parent=1 // pred_check
      _
    $region27: #{tpu_custom_call.1} parent=1 // pred_check_branch
      %329 = sbr.rel (0) target = $region29
    $region28: #{tpu_custom_call.1} parent=1 // pred_region
      %331 = vsyncadd [#allocation4], 0
      %s333 = sshll.u32 [#allocation8], 4
      %s334 = int_to_ptr.vmem [resolvable:$true] %s333
      %s335 = sshll.u32 %s3, 4
      %s336 = int_to_ptr.hbm [resolvable:$true] %s335
      %338 = dma.vmem_to_hbm [thread:$0]  %s334, 64, %s336, [#allocation4]
    $region29: #{tpu_custom_call.1} parent=1 // pred_fallthru
      _
    // Predicated region
    $region30: #{tpu_custom_call.1} parent=1 // pred_check
      _
    $region31: #{tpu_custom_call.1} parent=1 // pred_check_branch
      %340 = sbr.rel (0) target = $region33
    $region32: #{tpu_custom_call.1} parent=1 // pred_region
      %342 = dma.done [#allocation4], 64
    $region33: #{tpu_custom_call.1} parent=1 // pred_fallthru
      _
    %343 = vsyncpa [#allocation3], 1
    %344 = vsyncpa [#allocation6], 1
    %345 = vsyncpa [#allocation4], 1

</llo_original>
